<compile_context>
chip_gen: v5e
topology: v5e:2x2
jax: 0.10.0
libtpu: 0.0.40
codegen_flags: <defaults>
</compile_context>

<pallas_src>
import functools

import jax
import jax.numpy as jnp
from jax.experimental import pallas as pl
from jax.experimental.pallas import tpu as pltpu


def _contrastive_cosine_kernel(margin_ref, a_ref, n_ref, p_ref, out_ref, *,
                               true_b, eps):
    pid = pl.program_id(0)
    tb = a_ref.shape[0]

    a = a_ref[...].astype(jnp.float32)
    n = n_ref[...].astype(jnp.float32)
    p = p_ref[...].astype(jnp.float32)

    # Fused 5-reduction cosine formulation (no normalized tile copies).
    ss_a = jnp.sum(a * a, axis=-1, keepdims=True)      # (TB, 1)
    ss_p = jnp.sum(p * p, axis=-1, keepdims=True)
    ss_n = jnp.sum(n * n, axis=-1, keepdims=True)
    dot_ap = jnp.sum(a * p, axis=-1, keepdims=True)
    dot_an = jnp.sum(a * n, axis=-1, keepdims=True)

    # eps guard on the squared norms (matches F.normalize-style clamping and
    # avoids inf/NaN for all-zero rows); rsqrt lands on the otherwise idle EUP.
    inv_a = jax.lax.rsqrt(jnp.maximum(ss_a, eps))
    inv_p = jax.lax.rsqrt(jnp.maximum(ss_p, eps))
    inv_n = jax.lax.rsqrt(jnp.maximum(ss_n, eps))

    cos_ap = dot_ap * inv_a * inv_p                     # (TB, 1)
    cos_an = dot_an * inv_a * inv_n

    margin = margin_ref[0]
    hinge = jnp.maximum(cos_an - margin, 0.0)

    # Mask rows past the true batch size (last tile may be zero-padded).
    row = pid * tb + jax.lax.broadcasted_iota(jnp.int32, (tb, 1), 0)
    valid = row < true_b
    sum_cos = jnp.sum(jnp.where(valid, cos_ap, 0.0))
    sum_hinge = jnp.sum(jnp.where(valid, hinge, 0.0))

    # Lane-dense per-block partial output: lane 0 = sum(cos_ap), lane 1 = sum(hinge).
    lane = jax.lax.broadcasted_iota(jnp.int32, out_ref.shape, 2)
    out_ref[...] = jnp.where(lane == 0, sum_cos,
                             jnp.where(lane == 1, sum_hinge, 0.0))


def _pick_block_rows(feat_dim):
    """Largest batch tile so that 3 inputs x 2 pipeline buffers (at f32 compute
    width) stay within ~40% of this generation's VMEM."""
    try:
        vmem_bytes = int(pltpu.get_tpu_info().vmem_capacity_bytes)
    except Exception:
        vmem_bytes = 64 * 1024 * 1024  # conservative (v7x-sized) fallback
    budget = (2 * vmem_bytes) // 5
    tb = budget // (6 * feat_dim * 4)
    return max(8, min(4096, (tb // 8) * 8))


def contrastive_cosine(anchors, negatives, positives, margin=0.2, block_rows=None):
    """Scalar contrastive-cosine loss via a batch-tiled Pallas kernel."""
    assert anchors.shape == negatives.shape == positives.shape
    B, D = anchors.shape

    tb = int(block_rows) if block_rows is not None else _pick_block_rows(D)
    if B <= tb:
        tb = B              # single block covers the whole batch (any B allowed)
        grid_b = 1
    else:
        grid_b = pl.cdiv(B, tb)
        b_pad = grid_b * tb
        if b_pad != B:      # pad so every (tb, D) block is fully in bounds
            pad = ((0, b_pad - B), (0, 0))
            anchors = jnp.pad(anchors, pad)
            negatives = jnp.pad(negatives, pad)
            positives = jnp.pad(positives, pad)

    margin_arr = jnp.full((1,), margin, dtype=jnp.float32)

    try:
        vmem_limit = int(pltpu.get_tpu_info().vmem_capacity_bytes) * 3 // 4
    except Exception:
        vmem_limit = 48 * 1024 * 1024

    kernel = functools.partial(_contrastive_cosine_kernel, true_b=B, eps=1e-12)

    partials = pl.pallas_call(
        kernel,
        out_shape=jax.ShapeDtypeStruct((grid_b, 8, 128), jnp.float32),
        grid=(grid_b,),
        in_specs=[
            pl.BlockSpec(memory_space=pltpu.SMEM),        # margin scalar
            pl.BlockSpec((tb, D), lambda i: (i, 0)),      # anchors tile
            pl.BlockSpec((tb, D), lambda i: (i, 0)),      # negatives tile
            pl.BlockSpec((tb, D), lambda i: (i, 0)),      # positives tile
        ],
        out_specs=pl.BlockSpec((1, 8, 128), lambda i: (i, 0, 0)),
        compiler_params=pltpu.CompilerParams(
            dimension_semantics=("parallel",),
            vmem_limit_bytes=vmem_limit,
        ),
    )(margin_arr, anchors, negatives, positives)

    sum_cos = jnp.sum(partials[:, 0, 0])
    sum_hinge = jnp.sum(partials[:, 0, 1])
    pos_loss = 1.0 - sum_cos / B          # mean(1 - cos) folded algebraically
    neg_loss = sum_hinge / B
    return 0.5 * (pos_loss + neg_loss)


def _reference(anchors, negatives, positives, margin=0.2):
    # Pure-JAX reference mirroring the PyTorch module.
    def norm(x):
        return x / jnp.linalg.norm(x, axis=-1, keepdims=True)

    a, n, p = norm(anchors), norm(negatives), norm(positives)
    cos_ap = jnp.sum(a * p, axis=-1)
    cos_an = jnp.sum(a * n, axis=-1)
    pos_loss = jnp.mean(1.0 - cos_ap)
    neg_loss = jnp.mean(jnp.maximum(cos_an - margin, 0.0))
    return 0.5 * (pos_loss + neg_loss)


if __name__ == "__main__":
    key = jax.random.PRNGKey(0)

    # Primary check: small (batch, embedding_dim) inputs, single-block path.
    B, D = 8, 32
    k_a, k_n, k_p = jax.random.split(key, 3)
    anchors = jax.random.normal(k_a, (B, D), dtype=jnp.float32)
    negatives = jax.random.normal(k_n, (B, D), dtype=jnp.float32)
    positives = jax.random.normal(k_p, (B, D), dtype=jnp.float32)

    loss = jax.block_until_ready(
        contrastive_cosine(anchors, negatives, positives, margin=0.2))
    ref = _reference(anchors, negatives, positives, margin=0.2)
    assert jnp.allclose(loss, ref, atol=1e-5, rtol=1e-5), (loss, ref)

    # Tiled path: grid over batch blocks + ragged batch (masked padded rows).
    B2, D2 = 20, 32
    k_a2, k_n2, k_p2 = jax.random.split(jax.random.PRNGKey(1), 3)
    a2 = jax.random.normal(k_a2, (B2, D2), dtype=jnp.float32)
    n2 = jax.random.normal(k_n2, (B2, D2), dtype=jnp.float32)
    p2 = jax.random.normal(k_p2, (B2, D2), dtype=jnp.float32)
    loss2 = jax.block_until_ready(
        contrastive_cosine(a2, n2, p2, margin=0.35, block_rows=8))
    ref2 = _reference(a2, n2, p2, margin=0.35)
    assert jnp.allclose(loss2, ref2, atol=1e-5, rtol=1e-5), (loss2, ref2)

    # bf16 inputs: HBM traffic at bf16 width, f32 upcast inside the kernel.
    a3 = anchors.astype(jnp.bfloat16)
    n3 = negatives.astype(jnp.bfloat16)
    p3 = positives.astype(jnp.bfloat16)
    loss3 = jax.block_until_ready(contrastive_cosine(a3, n3, p3, margin=0.2))
    ref3 = _reference(a3.astype(jnp.float32), n3.astype(jnp.float32),
                      p3.astype(jnp.float32), margin=0.2)
    assert jnp.allclose(loss3, ref3, atol=1e-4, rtol=1e-4), (loss3, ref3)

    print("KERNEL_OK")
</pallas_src>

<mosaic_0001>
module attributes {stable_mosaic.version = 11 : i64} {
  func.func @_contrastive_cosine_kernel(%arg0: i32, %arg1: memref<1xf32, #tpu.memory_space<smem>>, %arg2: memref<8x32xf32, #tpu.memory_space<vmem>>, %arg3: memref<8x32xf32, #tpu.memory_space<vmem>>, %arg4: memref<8x32xf32, #tpu.memory_space<vmem>>, %arg5: memref<1x8x128xf32, #tpu.memory_space<vmem>>) attributes {dimension_semantics = [#tpu.dimension_semantics<parallel>], iteration_bounds = array<i64: 1>, scalar_prefetch = 0 : i64, scratch_operands = 0 : i64, tpu.core_type = #tpu.core_type<tc>, window_params = [{transform_indices = @transform_0, window_bounds = array<i64: 1>}, {transform_indices = @transform_1, window_bounds = array<i64: 8, 32>}, {transform_indices = @transform_2, window_bounds = array<i64: 8, 32>}, {transform_indices = @transform_3, window_bounds = array<i64: 8, 32>}, {transform_indices = @transform_4, window_bounds = array<i64: 1, 8, 128>}]} {
    %c0 = arith.constant 0 : index
    %c0_0 = arith.constant 0 : index
    %0 = vector.load %arg2[%c0, %c0_0] : memref<8x32xf32, #tpu.memory_space<vmem>>, vector<8x32xf32>
    %c0_1 = arith.constant 0 : index
    %c0_2 = arith.constant 0 : index
    %1 = vector.load %arg3[%c0_1, %c0_2] : memref<8x32xf32, #tpu.memory_space<vmem>>, vector<8x32xf32>
    %c0_3 = arith.constant 0 : index
    %c0_4 = arith.constant 0 : index
    %2 = vector.load %arg4[%c0_3, %c0_4] : memref<8x32xf32, #tpu.memory_space<vmem>>, vector<8x32xf32>
    %3 = arith.mulf %0, %0 : vector<8x32xf32>
    %cst = arith.constant dense<0.000000e+00> : vector<8xf32>
    %4 = vector.multi_reduction <add>, %3, %cst [1] : vector<8x32xf32> to vector<8xf32>
    %5 = vector.shape_cast %4 : vector<8xf32> to vector<8x1xf32>
    %6 = arith.mulf %2, %2 : vector<8x32xf32>
    %cst_5 = arith.constant dense<0.000000e+00> : vector<8xf32>
    %7 = vector.multi_reduction <add>, %6, %cst_5 [1] : vector<8x32xf32> to vector<8xf32>
    %8 = vector.shape_cast %7 : vector<8xf32> to vector<8x1xf32>
    %9 = arith.mulf %1, %1 : vector<8x32xf32>
    %cst_6 = arith.constant dense<0.000000e+00> : vector<8xf32>
    %10 = vector.multi_reduction <add>, %9, %cst_6 [1] : vector<8x32xf32> to vector<8xf32>
    %11 = vector.shape_cast %10 : vector<8xf32> to vector<8x1xf32>
    %12 = arith.mulf %0, %2 : vector<8x32xf32>
    %cst_7 = arith.constant dense<0.000000e+00> : vector<8xf32>
    %13 = vector.multi_reduction <add>, %12, %cst_7 [1] : vector<8x32xf32> to vector<8xf32>
    %14 = vector.shape_cast %13 : vector<8xf32> to vector<8x1xf32>
    %15 = arith.mulf %0, %1 : vector<8x32xf32>
    %cst_8 = arith.constant dense<0.000000e+00> : vector<8xf32>
    %16 = vector.multi_reduction <add>, %15, %cst_8 [1] : vector<8x32xf32> to vector<8xf32>
    %17 = vector.shape_cast %16 : vector<8xf32> to vector<8x1xf32>
    %cst_9 = arith.constant 9.99999996E-13 : f32
    %18 = vector.broadcast %cst_9 : f32 to vector<8x1xf32>
    %19 = arith.maximumf %5, %18 : vector<8x1xf32>
    %20 = math.rsqrt %19 : vector<8x1xf32>
    %cst_10 = arith.constant 9.99999996E-13 : f32
    %21 = vector.broadcast %cst_10 : f32 to vector<8x1xf32>
    %22 = arith.maximumf %8, %21 : vector<8x1xf32>
    %23 = math.rsqrt %22 : vector<8x1xf32>
    %cst_11 = arith.constant 9.99999996E-13 : f32
    %24 = vector.broadcast %cst_11 : f32 to vector<8x1xf32>
    %25 = arith.maximumf %11, %24 : vector<8x1xf32>
    %26 = math.rsqrt %25 : vector<8x1xf32>
    %27 = arith.mulf %14, %20 : vector<8x1xf32>
    %28 = arith.mulf %27, %23 : vector<8x1xf32>
    %29 = arith.mulf %17, %20 : vector<8x1xf32>
    %30 = arith.mulf %29, %26 : vector<8x1xf32>
    %c0_12 = arith.constant 0 : index
    %31 = memref.load %arg1[%c0_12] : memref<1xf32, #tpu.memory_space<smem>>
    %32 = vector.broadcast %31 : f32 to vector<8x1xf32>
    %33 = arith.subf %30, %32 : vector<8x1xf32>
    %cst_13 = arith.constant 0.000000e+00 : f32
    %34 = vector.broadcast %cst_13 : f32 to vector<8x1xf32>
    %35 = arith.maximumf %33, %34 : vector<8x1xf32>
    %c8_i32 = arith.constant 8 : i32
    %36 = arith.muli %arg0, %c8_i32 : i32
    %37 = tpu.iota {dimensions = array<i32: 0>} : vector<8x1xi32>
    %38 = vector.broadcast %36 : i32 to vector<8x1xi32>
    %39 = arith.addi %38, %37 : vector<8x1xi32>
    %c8_i32_14 = arith.constant 8 : i32
    %40 = vector.broadcast %c8_i32_14 : i32 to vector<8x1xi32>
    %41 = arith.cmpi slt, %39, %40 : vector<8x1xi32>
    %cst_15 = arith.constant 0.000000e+00 : f32
    %42 = vector.broadcast %cst_15 : f32 to vector<8x1xf32>
    %43 = arith.select %41, %28, %42 : vector<8x1xi1>, vector<8x1xf32>
    %44 = vector.shape_cast %43 : vector<8x1xf32> to vector<1x8x1xf32>
    %cst_16 = arith.constant dense<0.000000e+00> : vector<1xf32>
    %45 = vector.multi_reduction <add>, %44, %cst_16 [1, 2] : vector<1x8x1xf32> to vector<1xf32>
    %46 = vector.shape_cast %45 : vector<1xf32> to vector<1x1x1xf32>
    %47 = vector.extract %46[0, 0, 0] : f32 from vector<1x1x1xf32>
    %cst_17 = arith.constant 0.000000e+00 : f32
    %48 = vector.broadcast %cst_17 : f32 to vector<8x1xf32>
    %49 = arith.select %41, %35, %48 : vector<8x1xi1>, vector<8x1xf32>
    %50 = vector.shape_cast %49 : vector<8x1xf32> to vector<1x8x1xf32>
    %cst_18 = arith.constant dense<0.000000e+00> : vector<1xf32>
    %51 = vector.multi_reduction <add>, %50, %cst_18 [1, 2] : vector<1x8x1xf32> to vector<1xf32>
    %52 = vector.shape_cast %51 : vector<1xf32> to vector<1x1x1xf32>
    %53 = vector.extract %52[0, 0, 0] : f32 from vector<1x1x1xf32>
    %54 = tpu.iota {dimensions = array<i32: 2>} : vector<1x8x128xi32>
    %c0_i32 = arith.constant 0 : i32
    %55 = vector.broadcast %c0_i32 : i32 to vector<1x8x128xi32>
    %56 = arith.cmpi eq, %54, %55 : vector<1x8x128xi32>
    %c1_i32 = arith.constant 1 : i32
    %57 = vector.broadcast %c1_i32 : i32 to vector<1x8x128xi32>
    %58 = arith.cmpi eq, %54, %57 : vector<1x8x128xi32>
    %cst_19 = arith.constant 0.000000e+00 : f32
    %59 = vector.broadcast %53 : f32 to vector<1x8x128xf32>
    %60 = vector.broadcast %cst_19 : f32 to vector<1x8x128xf32>
    %61 = arith.select %58, %59, %60 : vector<1x8x128xi1>, vector<1x8x128xf32>
    %62 = vector.broadcast %47 : f32 to vector<1x8x128xf32>
    %63 = arith.select %56, %62, %61 : vector<1x8x128xi1>, vector<1x8x128xf32>
    %c0_20 = arith.constant 0 : index
    %c0_21 = arith.constant 0 : index
    %c0_22 = arith.constant 0 : index
    %64 = vector.load %arg5[%c0_20, %c0_21, %c0_22] : memref<1x8x128xf32, #tpu.memory_space<vmem>>, vector<1x8x128xf32>
    tpu.vector_store %arg5[%c0_20, %c0_21, %c0_22], %63 {strides = array<i32>} : memref<1x8x128xf32, #tpu.memory_space<vmem>>, vector<1x8x128xf32>,
    return
  }
  func.func @transform_0(%arg0: i32) -> i32 {
    %c0_i32 = arith.constant 0 : i32
    %c0_i32_0 = arith.constant 0 : i32
    return %c0_i32 : i32
  }
  func.func @transform_1(%arg0: i32) -> (i32, i32) {
    %c0_i32 = arith.constant 0 : i32
    %c0_i32_0 = arith.constant 0 : i32
    return %arg0, %c0_i32 : i32, i32
  }
  func.func @transform_2(%arg0: i32) -> (i32, i32) {
    %c0_i32 = arith.constant 0 : i32
    %c0_i32_0 = arith.constant 0 : i32
    return %arg0, %c0_i32 : i32, i32
  }
  func.func @transform_3(%arg0: i32) -> (i32, i32) {
    %c0_i32 = arith.constant 0 : i32
    %c0_i32_0 = arith.constant 0 : i32
    return %arg0, %c0_i32 : i32, i32
  }
  func.func @transform_4(%arg0: i32) -> (i32, i32, i32) {
    %c0_i32 = arith.constant 0 : i32
    %c0_i32_0 = arith.constant 0 : i32
    %c0_i32_1 = arith.constant 0 : i32
    return %arg0, %c0_i32, %c0_i32_0 : i32, i32, i32
  }
}

</mosaic_0001>

<llo_original>
// kernel: tpu_custom_call.1
$region0: #{tpu_custom_call.1}
  #allocation0 [shape = 'u32[]', space=smem, size = 0x4, offset = 0x4, fixed_abs, tag = 'smem constant byte address 0x4 - core index']
  #allocation1 [shape = 'u32[72,128]{1,0:T(1,128)}', space=vmem, size = 0x9000, scoped, tag = 'internal scratch']
  #allocation2 [shape = 'f32[1]{0:T(128)S(6)}', space=smem, size = 0x200, scoped, tag = 'scoped memory for tpu_custom_call.1']
  %s0 = inlined_call_operand.<no memory space> [shape: f32[1], index: 0, kind: input, shape index: {}]
  %s1 = inlined_call_operand.hbm [shape: f32[8,32], index: 1, kind: input, shape index: {}]
  %s2 = inlined_call_operand.hbm [shape: f32[8,32], index: 2, kind: input, shape index: {}]
  %s3 = inlined_call_operand.hbm [shape: f32[8,32], index: 3, kind: input, shape index: {}]
  %s4 = inlined_call_operand.hbm [shape: f32[1,8,128], index: 4, kind: output, shape index: {}]
  %s5 = sld [smem:[#allocation0]]
  $region38: #{tpu_custom_call.1} parent=0
    _
  %s7 = ssub.s32 1, %s5
  %s8 = scalar_select 0, %s7, %s5
  %9 = sst [smem:[#allocation2]] %s0
  $region1: #{tpu_custom_call.1} parent=0
    #allocation3 [shape = 'u8[4096]{0}', space=vmem, size = 0x1000, scoped, tag = 'input window, operand 1, single buffered']
    #allocation4 [shape = 's32[1]{0}', space=sflag, size = 0x4, scoped, tag = 'scoped memory for tpu_custom_call.1']
    #allocation5 [shape = 's32[1]{0}', space=sflag, size = 0x4, scoped, tag = 'scoped memory for tpu_custom_call.1']
    #allocation6 [shape = 'u8[4096]{0}', space=vmem, size = 0x1000, scoped, tag = 'input window, operand 2, single buffered']
    #allocation7 [shape = 's32[1]{0}', space=sflag, size = 0x4, scoped, tag = 'scoped memory for tpu_custom_call.1']
    #allocation8 [shape = 'u8[4096]{0}', space=vmem, size = 0x1000, scoped, tag = 'input window, operand 3, single buffered']
    #allocation9 [shape = 'u8[4096]{0}', space=vmem, size = 0x1000, scoped, tag = 'output window, operand 0, single buffered']
    %10 = vsyncpa [#allocation4], 0
    %11 = vsyncpa [#allocation7], 0
    %12 = vsyncpa [#allocation5], 0
    // Predicated region
    $region2: #{tpu_custom_call.1} parent=1 // pred_check
      _
    $region3: #{tpu_custom_call.1} parent=1 // pred_check_branch
      %14 = sbr.rel (0) target = $region5
    $region4: #{tpu_custom_call.1} parent=1 // pred_region
      _
    $region5: #{tpu_custom_call.1} parent=1 // pred_fallthru
      _
    // Predicated region
    $region6: #{tpu_custom_call.1} parent=1 // pred_check
      _
    $region7: #{tpu_custom_call.1} parent=1 // pred_check_branch
      %16 = sbr.rel (0) target = $region9
    $region8: #{tpu_custom_call.1} parent=1 // pred_region
      %18 = vsyncadd [#allocation4], 0
      %s20 = sshll.u32 %s1, 4
      %s21 = int_to_ptr.hbm [resolvable:$true] %s20
      %s22 = sshll.u32 [#allocation3], 4
      %s23 = int_to_ptr.vmem [resolvable:$true] %s22
      %25 = dma.hbm_to_vmem [thread:$0]  %s21, 128, %s23, [#allocation4]
    $region9: #{tpu_custom_call.1} parent=1 // pred_fallthru
      _
    // Predicated region
    $region10: #{tpu_custom_call.1} parent=1 // pred_check
      _
    $region11: #{tpu_custom_call.1} parent=1 // pred_check_branch
      %27 = sbr.rel (0) target = $region13
    $region12: #{tpu_custom_call.1} parent=1 // pred_region
      %29 = vsyncadd [#allocation7], 0
      %s31 = sshll.u32 %s2, 4
      %s32 = int_to_ptr.hbm [resolvable:$true] %s31
      %s33 = sshll.u32 [#allocation6], 4
      %s34 = int_to_ptr.vmem [resolvable:$true] %s33
      %36 = dma.hbm_to_vmem [thread:$0]  %s32, 128, %s34, [#allocation7]
    $region13: #{tpu_custom_call.1} parent=1 // pred_fallthru
      _
    // Predicated region
    $region14: #{tpu_custom_call.1} parent=1 // pred_check
      _
    $region15: #{tpu_custom_call.1} parent=1 // pred_check_branch
      %38 = sbr.rel (0) target = $region17
    $region16: #{tpu_custom_call.1} parent=1 // pred_region
      %40 = vsyncadd [#allocation7], 0
      %s42 = sshll.u32 %s3, 4
      %s43 = int_to_ptr.hbm [resolvable:$true] %s42
      %s44 = sshll.u32 [#allocation8], 4
      %s45 = int_to_ptr.vmem [resolvable:$true] %s44
      %47 = dma.hbm_to_vmem [thread:$0]  %s43, 128, %s45, [#allocation7]
    $region17: #{tpu_custom_call.1} parent=1 // pred_fallthru
      _
    // Predicated region
    $region18: #{tpu_custom_call.1} parent=1 // pred_check
      _
    $region19: #{tpu_custom_call.1} parent=1 // pred_check_branch
      %49 = sbr.rel (0) target = $region21
    $region20: #{tpu_custom_call.1} parent=1 // pred_region
      %51 = dma.done [#allocation4], 128
    $region21: #{tpu_custom_call.1} parent=1 // pred_fallthru
      _
    // Predicated region
    $region22: #{tpu_custom_call.1} parent=1 // pred_check
      _
    $region23: #{tpu_custom_call.1} parent=1 // pred_check_branch
      %53 = sbr.rel (0) target = $region25
    $region24: #{tpu_custom_call.1} parent=1 // pred_region
      %55 = dma.done [#allocation7], 128
    $region25: #{tpu_custom_call.1} parent=1 // pred_fallthru
      _
    // Predicated region
    $region26: #{tpu_custom_call.1} parent=1 // pred_check
      _
    $region27: #{tpu_custom_call.1} parent=1 // pred_check_branch
      %57 = sbr.rel (0) target = $region29
    $region28: #{tpu_custom_call.1} parent=1 // pred_region
      %59 = dma.done [#allocation7], 128
    $region29: #{tpu_custom_call.1} parent=1 // pred_fallthru
      _
    %v60 = vld [vmem:[#allocation3] sm:$0xff]
    %v61 = vld [vmem:[#allocation6] sm:$0xff]
    %v62 = vld [vmem:[#allocation8] sm:$0xff]
    %v63 = vmul.f32 %v60, %v60
    %vm64 = vcmask 261120
    %v65 = vsel %vm64, %v63, 0.0
    %66 = vadd.xlane.f32.xlu0 %v65
    %v67 = vpop.xlane.xlu0 %66
    %v68 = vmul.f32 %v62, %v62
    %v69 = vsel %vm64, %v68, 0.0
    %70 = vadd.xlane.f32.xlu0 %v69
    %v71 = vpop.xlane.xlu0 %70
    %v72 = vmul.f32 %v61, %v61
    %v73 = vsel %vm64, %v72, 0.0
    %74 = vadd.xlane.f32.xlu0 %v73
    %v75 = vpop.xlane.xlu0 %74
    %v76 = vmul.f32 %v60, %v62
    %v77 = vsel %vm64, %v76, 0.0
    %78 = vadd.xlane.f32.xlu0 %v77
    %v79 = vpop.xlane.xlu0 %78
    %v80 = vmul.f32 %v60, %v61
    %v81 = vsel %vm64, %v80, 0.0
    %82 = vadd.xlane.f32.xlu0 %v81
    %v83 = vpop.xlane.xlu0 %82
    %v84 = vmax.f32 %v67, 1e-12
    %v85 = vrsqrt.pop %v84
    %v86 = vmul.f32 %v85, %v84
    %v87 = vmul.f32 %v86, %v85
    %v88 = vmul.f32 0.5, %v87
    %v89 = vsub.f32 1.5, %v88
    %v90 = vmul.f32 %v85, %v89
    %vm91 = vweird.f32 %v84
    %vm92 = vweird.f32 %v85
    %vm93 = vmor %vm91, %vm92
    %v94 = vsel %vm93, %v85, %v90
    %v95 = vmax.f32 %v71, 1e-12
    %v96 = vrsqrt.pop %v95
    %v97 = vmul.f32 %v96, %v95
    %v98 = vmul.f32 %v97, %v96
    %v99 = vmul.f32 0.5, %v98
    %v100 = vsub.f32 1.5, %v99
    %v101 = vmul.f32 %v96, %v100
    %vm102 = vweird.f32 %v95
    %vm103 = vweird.f32 %v96
    %vm104 = vmor %vm102, %vm103
    %v105 = vsel %vm104, %v96, %v101
    %v106 = vmax.f32 %v75, 1e-12
    %v107 = vrsqrt.pop %v106
    %v108 = vmul.f32 %v107, %v106
    %v109 = vmul.f32 %v108, %v107
    %v110 = vmul.f32 0.5, %v109
    %v111 = vsub.f32 1.5, %v110
    %v112 = vmul.f32 %v107, %v111
    %vm113 = vweird.f32 %v106
    %vm114 = vweird.f32 %v107
    %vm115 = vmor %vm113, %vm114
    %v116 = vsel %vm115, %v107, %v112
    %v117 = vmul.f32 %v79, %v94
    %v118 = vmul.f32 %v117, %v105
    %v119 = vmul.f32 %v83, %v94
    %v120 = vmul.f32 %v119, %v116
    %s121 = sld [smem:[#allocation2]]
    %v122 = vstv %s121
    %v123 = vsub.f32 %v120, %v122
    %v124 = vmax.f32 %v123, 0.0
    %s125 = smul.u32 0, 8
    %v126 = vlaneseq
    %v127 = vshrl.u32 %v126, 7
    %v128 = vstv %s125
    %v129 = vadd.s32 %v128, %v127
    %vm130 = vcmp.lt.s32.totalorder %v129, 8
    %v131 = vsel %vm130, %v118, 0.0
    %vm132 = vcmask 7168
    %v133 = vsel %vm132, %v131, 0.0
    %134 = vadd.xlane.f32.xlu0 %v133
    %v135 = vpop.xlane.xlu0 %134
    %v136 = vrot.slane %v135, 4
    %v137 = vadd.f32 %v135, %v136
    %v138 = vrot.slane %v137, 2
    %v139 = vadd.f32 %v137, %v138
    %v140 = vrot.slane %v139, 1
    %v141 = vadd.f32 %v139, %v140
    %s142 = vtos %v141
    %v143 = vsel %vm130, %v124, 0.0
    %v144 = vsel %vm132, %v143, 0.0
    %145 = vadd.xlane.f32.xlu0 %v144
    %v146 = vpop.xlane.xlu0 %145
    %v147 = vrot.slane %v146, 4
    %v148 = vadd.f32 %v146, %v147
    %v149 = vrot.slane %v148, 2
    %v150 = vadd.f32 %v148, %v149
    %v151 = vrot.slane %v150, 1
    %v152 = vadd.f32 %v150, %v151
    %s153 = vtos %v152
    %v154 = vlaneseq
    %v155 = vand.u32 %v154, 127
    %vm156 = vcmp.eq.s32.totalorder %v155, 0
    %vm157 = vcmp.eq.s32.totalorder %v155, 1
    %v158 = vstv %s153
    %v159 = vsel %vm157, %v158, 0.0
    %v160 = vstv %s142
    %v161 = vsel %vm156, %v160, %v159
    %162 = vst [vmem:[#allocation9] sm:$0xff] %v161
    // Predicated region
    $region30: #{tpu_custom_call.1} parent=1 // pred_check
      _
    $region31: #{tpu_custom_call.1} parent=1 // pred_check_branch
      %164 = sbr.rel (0) target = $region33
    $region32: #{tpu_custom_call.1} parent=1 // pred_region
      %166 = vsyncadd [#allocation5], 0
      %s168 = sshll.u32 [#allocation9], 4
      %s169 = int_to_ptr.vmem [resolvable:$true] %s168
      %s170 = sshll.u32 %s4, 4
      %s171 = int_to_ptr.hbm [resolvable:$true] %s170
      %173 = dma.vmem_to_hbm [thread:$0]  %s169, 128, %s171, [#allocation5]
    $region33: #{tpu_custom_call.1} parent=1 // pred_fallthru
      _
    // Predicated region
    $region34: #{tpu_custom_call.1} parent=1 // pred_check
      _
    $region35: #{tpu_custom_call.1} parent=1 // pred_check_branch
      %175 = sbr.rel (0) target = $region37
    $region36: #{tpu_custom_call.1} parent=1 // pred_region
      %177 = dma.done [#allocation5], 128
    $region37: #{tpu_custom_call.1} parent=1 // pred_fallthru
      _
    %178 = vsyncpa [#allocation4], 1
    %179 = vsyncpa [#allocation7], 1
    %180 = vsyncpa [#allocation5], 1

</llo_original>
